<compile_context>
chip_gen: v7x
topology: tpu7x:2x2x1
jax: 0.10.0
libtpu: 0.0.40
codegen_flags: <defaults>
</compile_context>

<pallas_src>
import math
from functools import partial

import jax
import jax.numpy as jnp
from jax.experimental import pallas as pl
from jax.experimental.pallas import tpu as pltpu

_LANES = 128
_TARGET_BLOCK_BYTES = 2 * 1024 * 1024  # ~2 MiB per block (per perf review)


# ----------------------------------------------------------------------------
# Activation registry (mirrors Activation._registy) -- pure jnp functions that
# are traced INSIDE the Pallas kernel body.
# ----------------------------------------------------------------------------
def _relu(x):
    return jnp.maximum(x, 0.0)


def _gelu(x):
    # tanh approximation.
    # TODO(synk): PyTorch's default F.gelu is the exact erf form; switch if the
    # original registry registered the exact variant.
    c = math.sqrt(2.0 / math.pi)
    return 0.5 * x * (1.0 + jnp.tanh(c * (x + 0.044715 * x * x * x)))


def _sigmoid(x):
    # exp() lands on the EUP; the divide is cheap in this mem-bound kernel.
    return 1.0 / (1.0 + jnp.exp(-x))


def _tanh(x):
    return jnp.tanh(x)


def _elu(x):
    # Clamp the exp argument so the discarded branch never produces inf.
    return jnp.where(x > 0, x, jnp.exp(jnp.minimum(x, 0.0)) - 1.0)


def _leaky_relu(x):
    return jnp.where(x > 0, x, 0.01 * x)


def _silu(x):
    return x * _sigmoid(x)


_REGISTRY = {
    "relu": _relu,
    "gelu": _gelu,
    "sigmoid": _sigmoid,
    "tanh": _tanh,
    "elu": _elu,
    "leaky_relu": _leaky_relu,
    "silu": _silu,
}


# ----------------------------------------------------------------------------
# Pallas kernel: elementwise activation on a [block_rows, 128] VMEM tile.
# ----------------------------------------------------------------------------
def _activation_kernel(x_ref, o_ref, *, act_fn, compute_dtype):
    x = x_ref[...]
    if x.dtype != compute_dtype:
        x = x.astype(compute_dtype)
    o_ref[...] = act_fn(x).astype(o_ref.dtype)


def _round_up(n, m):
    return ((n + m - 1) // m) * m


def _apply_activation_2d(x2d, act_fn):
    rows, cols = x2d.shape
    assert cols == _LANES

    dtype = x2d.dtype
    itemsize = jnp.dtype(dtype).itemsize
    # Sub-32-bit dtypes pack along sublanes: row tile must be a multiple of
    # 8 * packing (8 for f32, 16 for bf16, 32 for int8).
    packing = max(1, 4 // itemsize)
    sub_mult = 8 * packing

    # ~2 MiB per block, rounded to the packed-sublane multiple, never larger
    # than the (rounded-up) array itself.
    target_rows = max(sub_mult, _TARGET_BLOCK_BYTES // (cols * itemsize))
    block_rows = min(target_rows, _round_up(rows, sub_mult))
    block_rows = _round_up(block_rows, sub_mult)

    # Compute in native dtype for f32 / bf16 (bf16 VPU/EUP on v6e/v7x);
    # upcast anything else to f32.
    if dtype in (jnp.float32, jnp.bfloat16):
        compute_dtype = dtype
    else:
        compute_dtype = jnp.float32

    grid = (pl.cdiv(rows, block_rows),)
    return pl.pallas_call(
        partial(_activation_kernel, act_fn=act_fn, compute_dtype=compute_dtype),
        out_shape=jax.ShapeDtypeStruct((rows, cols), dtype),
        grid=grid,
        in_specs=[pl.BlockSpec((block_rows, cols), lambda i: (i, 0))],
        out_specs=pl.BlockSpec((block_rows, cols), lambda i: (i, 0)),
        compiler_params=pltpu.CompilerParams(
            dimension_semantics=("parallel",),
        ),
    )(x2d)


class Activation:
    """JAX/Pallas counterpart of the PyTorch Activation registry module."""

    _registy = _REGISTRY  # keep the (sic) original attribute name

    def __init__(self, name: str) -> None:
        if name not in Activation._registy:
            raise Exception("Inavalid activation name.")
        self._name = name
        self._act_fn = Activation._registy[name]

    def __repr__(self) -> str:
        return f"{self.__class__.__name__}({self._name})"

    @classmethod
    def by_name(cls, name: str) -> "Activation":
        if name in Activation._registy:
            return cls(name)
        raise Exception("Inavalid activation name.")

    def __call__(self, x: jnp.ndarray) -> jnp.ndarray:
        orig_shape = x.shape
        orig_dtype = x.dtype
        n = x.size
        if n == 0:
            return x

        if n % _LANES == 0:
            # Free lane-dense view: no extra HBM passes.
            x2d = x.reshape(n // _LANES, _LANES)
            y2d = _apply_activation_2d(x2d, self._act_fn)
            return y2d.reshape(orig_shape).astype(orig_dtype)

        # Fallback for sizes not divisible by 128: zero-pad once, slice after.
        # Safe because the padded region is discarded before returning.
        n_pad = _round_up(n, _LANES)
        flat = jnp.ravel(x)
        flat = jnp.concatenate([flat, jnp.zeros((n_pad - n,), dtype=orig_dtype)])
        x2d = flat.reshape(n_pad // _LANES, _LANES)
        y2d = _apply_activation_2d(x2d, self._act_fn)
        return y2d.reshape(-1)[:n].reshape(orig_shape).astype(orig_dtype)


# ----------------------------------------------------------------------------
# Demo / self-test
# ----------------------------------------------------------------------------
if __name__ == "__main__":
    key = jax.random.PRNGKey(0)
    k1, k2, k3 = jax.random.split(key, 3)

    # 1) NCHW input as a conv stack would produce (size divisible by 128).
    x = jax.random.normal(k1, (2, 4, 16, 16), dtype=jnp.float32)

    act = Activation.by_name("relu")
    y = jax.block_until_ready(act(x))
    ref = jnp.maximum(x, 0.0)
    assert y.shape == x.shape and y.dtype == x.dtype
    assert jnp.max(jnp.abs(y - ref)) < 1e-6

    act_gelu = Activation.by_name("gelu")
    y2 = jax.block_until_ready(act_gelu(x))
    ref2 = jax.nn.gelu(x, approximate=True)
    assert jnp.max(jnp.abs(y2 - ref2)) < 1e-4

    # 2) Larger tensor to exercise the multi-block pipelined grid (rows=8192,
    #    block_rows=4096 -> grid=(2,)).
    xl = jax.random.normal(k2, (16, 4, 128, 128), dtype=jnp.float32)
    act_silu = Activation.by_name("silu")
    y3 = jax.block_until_ready(act_silu(xl))
    ref3 = jax.nn.silu(xl)
    assert jnp.max(jnp.abs(y3 - ref3)) < 1e-5

    # 3) Odd-sized tensor to exercise the pad fallback path.
    xo = jax.random.normal(k3, (2, 3, 5, 7), dtype=jnp.float32)
    act_tanh = Activation.by_name("tanh")
    y4 = jax.block_until_ready(act_tanh(xo))
    ref4 = jnp.tanh(xo)
    assert y4.shape == xo.shape
    assert jnp.max(jnp.abs(y4 - ref4)) < 1e-6

    print("KERNEL_OK")
</pallas_src>

<mosaic_0001>
module attributes {stable_mosaic.version = 11 : i64} {
  func.func @_activation_kernel(%arg0: i32, %arg1: memref<16x128xf32, #tpu.memory_space<vmem>>, %arg2: memref<16x128xf32, #tpu.memory_space<vmem>>) attributes {dimension_semantics = [#tpu.dimension_semantics<parallel>], iteration_bounds = array<i64: 1>, scalar_prefetch = 0 : i64, scratch_operands = 0 : i64, tpu.core_type = #tpu.core_type<tc>, window_params = [{transform_indices = @transform_0, window_bounds = array<i64: 16, 128>}, {transform_indices = @transform_1, window_bounds = array<i64: 16, 128>}]} {
    %c0 = arith.constant 0 : index
    %c0_0 = arith.constant 0 : index
    %0 = vector.load %arg1[%c0, %c0_0] : memref<16x128xf32, #tpu.memory_space<vmem>>, vector<16x128xf32>
    %cst = arith.constant 0.000000e+00 : f32
    %1 = vector.broadcast %cst : f32 to vector<16x128xf32>
    %2 = arith.maximumf %0, %1 : vector<16x128xf32>
    %c0_1 = arith.constant 0 : index
    %c0_2 = arith.constant 0 : index
    %3 = vector.load %arg2[%c0_1, %c0_2] : memref<16x128xf32, #tpu.memory_space<vmem>>, vector<16x128xf32>
    tpu.vector_store %arg2[%c0_1, %c0_2], %2 {strides = array<i32>} : memref<16x128xf32, #tpu.memory_space<vmem>>, vector<16x128xf32>,
    return
  }
  func.func @transform_0(%arg0: i32) -> (i32, i32) {
    %c0_i32 = arith.constant 0 : i32
    %c0_i32_0 = arith.constant 0 : i32
    return %arg0, %c0_i32 : i32, i32
  }
  func.func @transform_1(%arg0: i32) -> (i32, i32) {
    %c0_i32 = arith.constant 0 : i32
    %c0_i32_0 = arith.constant 0 : i32
    return %arg0, %c0_i32 : i32, i32
  }
}

</mosaic_0001>

<llo_original>
// kernel: tpu_custom_call.1
$region0: #{tpu_custom_call.1}
  #allocation0 [shape = 'u32[]', space=smem, size = 0x4, offset = 0x4, fixed_abs, tag = 'smem constant byte address 0x4 - core index']
  #allocation1 [shape = 'u32[144,128]{1,0:T(1,128)}', space=vmem, size = 0x12000, scoped, tag = 'internal scratch']
  %s0 = inlined_call_operand.hbm [shape: f32[16,128], index: 0, kind: input, shape index: {}]
  %s1 = inlined_call_operand.hbm [shape: f32[16,128], index: 1, kind: output, shape index: {}]
  %s2 = sld [smem:[#allocation0]]
  $region18: #{tpu_custom_call.1} parent=0
    _
  %s4 = ssub.s32 1, %s2
  %s5 = scalar_select 0, %s4, %s2
  $region1: #{tpu_custom_call.1} parent=0
    #allocation2 [shape = 'u8[8192]{0}', space=vmem, size = 0x2000, scoped, tag = 'input window, operand 0, single buffered']
    #allocation3 [shape = 's32[1]{0}', space=sflag, size = 0x4, scoped, tag = 'scoped memory for tpu_custom_call.1']
    #allocation4 [shape = 's32[1]{0}', space=sflag, size = 0x4, scoped, tag = 'scoped memory for tpu_custom_call.1']
    #allocation5 [shape = 'u8[8192]{0}', space=vmem, size = 0x2000, scoped, tag = 'output window, operand 0, single buffered']
    %6 = vsyncpa [#allocation3], 0
    %7 = vsyncpa [#allocation4], 0
    // Predicated region
    $region2: #{tpu_custom_call.1} parent=1 // pred_check
      _
    $region3: #{tpu_custom_call.1} parent=1 // pred_check_branch
      %9 = sbr.rel (0) target = $region5
    $region4: #{tpu_custom_call.1} parent=1 // pred_region
      %s11 = ssub.s32 256, 256
      %12 = vsyncadd [#allocation3], %s11
      %s13 = sshll.u32 [#allocation2], 4
      %s14 = int_to_ptr.vmem [resolvable:$true] %s13
      %19 = dma.hbm_to_vmem [thread:$0]  %s0, 256, %s14, [#allocation3], 128, 128, 8
    $region5: #{tpu_custom_call.1} parent=1 // pred_fallthru
      _
    // Predicated region
    $region6: #{tpu_custom_call.1} parent=1 // pred_check
      _
    $region7: #{tpu_custom_call.1} parent=1 // pred_check_branch
      %21 = sbr.rel (0) target = $region9
    $region8: #{tpu_custom_call.1} parent=1 // pred_region
      %22 = dma.done [#allocation3], 256
    $region9: #{tpu_custom_call.1} parent=1 // pred_fallthru
      _
    %v23 = vld [vmem:[#allocation2] sm:$0xff]
    %v24 = vld [vmem:[#allocation2 + $0x8] sm:$0xff]
    %v25 = vmax.f32 %v23, 0.0
    %v26 = vmax.f32 %v24, 0.0
    %27 = vst [vmem:[#allocation5] sm:$0xff] %v25
    %28 = vst [vmem:[#allocation5 + $0x8] sm:$0xff] %v26
    // Predicated region
    $region10: #{tpu_custom_call.1} parent=1 // pred_check
      _
    $region11: #{tpu_custom_call.1} parent=1 // pred_check_branch
      %30 = sbr.rel (0) target = $region13
    $region12: #{tpu_custom_call.1} parent=1 // pred_region
      %s32 = ssub.s32 256, 256
      %33 = vsyncadd [#allocation4], %s32
      %s34 = sshll.u32 [#allocation5], 4
      %s35 = int_to_ptr.vmem [resolvable:$true] %s34
      %40 = dma.vmem_to_hbm [thread:$0]  %s35, 256, %s1, [#allocation4], 128, 128, 8
    $region13: #{tpu_custom_call.1} parent=1 // pred_fallthru
      _
    // Predicated region
    $region14: #{tpu_custom_call.1} parent=1 // pred_check
      _
    $region15: #{tpu_custom_call.1} parent=1 // pred_check_branch
      %42 = sbr.rel (0) target = $region17
    $region16: #{tpu_custom_call.1} parent=1 // pred_region
      %43 = dma.done [#allocation4], 256
    $region17: #{tpu_custom_call.1} parent=1 // pred_fallthru
      _
    %44 = vsyncpa [#allocation3], 1
    %45 = vsyncpa [#allocation4], 1

</llo_original>
